<compile_context>
chip_gen: v6e
topology: v6e:2x2x1
jax: 0.10.0
libtpu: 0.0.40
codegen_flags: <defaults>
</compile_context>

<pallas_src>
import jax
import jax.numpy as jnp
from jax.experimental import pallas as pl
from jax.experimental.pallas import tpu as pltpu

EPS = 1e-5


def _fused_bn(h, gamma, beta, inv_b):
    """Training-mode BatchNorm1d: single reduction pass + single scale/shift."""
    s = jnp.sum(h, axis=0, keepdims=True)
    sq = jnp.sum(h * h, axis=0, keepdims=True)
    mean = s * inv_b
    var = jnp.maximum(sq * inv_b - mean * mean, 0.0)   # biased var; clamp tiny negatives
    scale = gamma * jax.lax.rsqrt(var + EPS)           # EUP rsqrt
    shift = beta - mean * scale
    return h * scale + shift


def bn_mlp_kernel(x_ref, w1_ref, v1_ref, w2_ref, w3_ref, v2_ref, o_ref):
    cdt = w1_ref.dtype            # MXU operand dtype (f32 or bf16)
    inv_b = 1.0 / x_ref.shape[0]  # static batch size -> compile-time constant

    v1 = v1_ref[...]              # (3, 256): b1, g1, be1          (f32)
    v2 = v2_ref[...]              # (4, 128): b2, g2, be2, b3_pad  (f32)
    b1, g1, be1 = v1[0:1, :], v1[1:2, :], v1[2:3, :]
    b2, g2, be2, b3 = v2[0:1, :], v2[1:2, :], v2[2:3, :], v2[3:4, :]

    # ---- fc1 + relu + bn1 ----
    h = jnp.dot(x_ref[...].astype(cdt), w1_ref[...],
                preferred_element_type=jnp.float32) + b1
    h = jnp.maximum(h, 0.0)
    h = _fused_bn(h, g1, be1, inv_b)

    # ---- fc2 + relu + bn2 ----
    h = jnp.dot(h.astype(cdt), w2_ref[...],
                preferred_element_type=jnp.float32) + b2
    h = jnp.maximum(h, 0.0)
    h = _fused_bn(h, g2, be2, inv_b)

    # ---- fc3 (lane-dense: 128 output columns, cols 10..127 are zero) ----
    o_ref[...] = jnp.dot(h.astype(cdt), w3_ref[...],
                         preferred_element_type=jnp.float32) + b3


def bn_model_forward(x, params, compute_dtype=jnp.bfloat16):
    """x: (B, 1, 28, 28) float32 (NCHW).  Returns (B, 10) float32.

    compute_dtype controls the MXU operand dtype only (weights + activations
    fed to jnp.dot); all BN / bias / ReLU math stays float32.
    """
    B = x.shape[0]
    x2d = x.reshape(B, -1).astype(jnp.float32)   # == torch x.view(B, -1)

    (w1, b1, g1, be1, w2, b2, g2, be2, w3, b3) = params

    # Lane-dense fc3: pad the 10-wide output dimension to 128 with zeros.
    w3p = jnp.zeros((w3.shape[0], 128), jnp.float32).at[:, :10].set(w3)
    b3p = jnp.zeros((128,), jnp.float32).at[:10].set(b3)

    # Pack the small per-layer vectors (f32, used on the VPU side).
    v1 = jnp.stack([b1, g1, be1], axis=0)          # (3, 256)
    v2 = jnp.stack([b2, g2, be2, b3p], axis=0)     # (4, 128)

    # Weights in the MXU compute dtype (bf16 halves weight HBM traffic).
    w1c = w1.astype(compute_dtype)
    w2c = w2.astype(compute_dtype)
    w3c = w3p.astype(compute_dtype)

    vmem = pl.BlockSpec(memory_space=pltpu.MemorySpace.VMEM)
    args = (x2d, w1c, v1, w2c, w3c, v2)

    out = pl.pallas_call(
        bn_mlp_kernel,
        out_shape=jax.ShapeDtypeStruct((B, 128), jnp.float32),
        in_specs=[vmem] * len(args),
        out_specs=vmem,
    )(*args)
    return out[:, :10]


def init_params(key):
    """Deterministic init mirroring the PyTorch module's parameter shapes.
    Linear weights are stored pre-transposed as (in, out)."""
    ks = jax.random.split(key, 6)

    def linear(kw, kb, n_in, n_out):
        lim = 1.0 / jnp.sqrt(jnp.float32(n_in))
        w = jax.random.uniform(kw, (n_in, n_out), jnp.float32, -lim, lim)
        b = jax.random.uniform(kb, (n_out,), jnp.float32, -lim, lim)
        return w, b

    w1, b1 = linear(ks[0], ks[1], 28 * 28, 256)
    w2, b2 = linear(ks[2], ks[3], 256, 128)
    w3, b3 = linear(ks[4], ks[5], 128, 10)

    # BatchNorm1d affine params (PyTorch default: weight=1, bias=0)
    g1 = jnp.ones((256,), jnp.float32)
    be1 = jnp.zeros((256,), jnp.float32)
    g2 = jnp.ones((128,), jnp.float32)
    be2 = jnp.zeros((128,), jnp.float32)

    return (w1, b1, g1, be1, w2, b2, g2, be2, w3, b3)


def reference_forward(x, params, compute_dtype=jnp.float32):
    """Pure-JAX reference (two-pass BN, PyTorch training-mode semantics).
    compute_dtype mirrors the kernel's MXU operand dtype for apples-to-apples
    validation of the bf16 variant."""
    (w1, b1, g1, be1, w2, b2, g2, be2, w3, b3) = params
    h = x.reshape(x.shape[0], -1).astype(jnp.float32)

    def mm(a, w, b):
        return jnp.dot(a.astype(compute_dtype), w.astype(compute_dtype),
                       preferred_element_type=jnp.float32) + b

    def bn(h, g, be):
        m = jnp.mean(h, axis=0, keepdims=True)
        v = jnp.mean((h - m) ** 2, axis=0, keepdims=True)
        return (h - m) / jnp.sqrt(v + EPS) * g + be

    h = bn(jnp.maximum(mm(h, w1, b1), 0.0), g1, be1)
    h = bn(jnp.maximum(mm(h, w2, b2), 0.0), g2, be2)
    return mm(h, w3, b3)


if __name__ == "__main__":
    key = jax.random.PRNGKey(0)
    k_x, k_p = jax.random.split(key)

    B = 8  # multiple of 8 -> f32 sublane aligned
    x = jax.random.normal(k_x, (B, 1, 28, 28), jnp.float32)  # NCHW, MNIST-like
    params = init_params(k_p)

    # 1) Strict semantics check: f32 MXU operands vs the f32 JAX reference.
    #    (Tolerance slightly relaxed vs 1e-4 because the kernel uses the fused
    #     one-pass variance E[h^2] - mean^2 formulation.)
    out_f32 = jax.block_until_ready(
        bn_model_forward(x, params, compute_dtype=jnp.float32))
    ref_f32 = reference_forward(x, params, compute_dtype=jnp.float32)
    assert out_f32.shape == (B, 10)
    assert jnp.allclose(out_f32, ref_f32, atol=1e-3, rtol=1e-3), \
        "f32 kernel mismatch vs JAX reference"

    # 2) Performance variant (default): bf16 MXU operands (v6e/v7x native),
    #    validated against a matching mixed-precision reference.
    out_bf16 = jax.block_until_ready(
        bn_model_forward(x, params, compute_dtype=jnp.bfloat16))
    ref_bf16 = reference_forward(x, params, compute_dtype=jnp.bfloat16)
    assert out_bf16.shape == (B, 10)
    assert jnp.allclose(out_bf16, ref_bf16, atol=2e-2, rtol=2e-2), \
        "bf16 kernel mismatch vs mixed-precision JAX reference"

    print("KERNEL_OK")
</pallas_src>

<mosaic_0001>
module attributes {stable_mosaic.version = 11 : i64} {
  func.func @bn_mlp_kernel(%arg0: memref<8x784xf32, #tpu.memory_space<vmem>>, %arg1: memref<784x256xf32, #tpu.memory_space<vmem>>, %arg2: memref<3x256xf32, #tpu.memory_space<vmem>>, %arg3: memref<256x128xf32, #tpu.memory_space<vmem>>, %arg4: memref<128x128xf32, #tpu.memory_space<vmem>>, %arg5: memref<4x128xf32, #tpu.memory_space<vmem>>, %arg6: memref<8x128xf32, #tpu.memory_space<vmem>>) attributes {dimension_semantics = [], scalar_prefetch = 0 : i64, scratch_operands = 0 : i64, tpu.core_type = #tpu.core_type<tc>} {
    %c0 = arith.constant 0 : index
    %c0_0 = arith.constant 0 : index
    %0 = vector.load %arg2[%c0, %c0_0] : memref<3x256xf32, #tpu.memory_space<vmem>>, vector<3x256xf32>
    %c0_1 = arith.constant 0 : index
    %c0_2 = arith.constant 0 : index
    %1 = vector.load %arg5[%c0_1, %c0_2] : memref<4x128xf32, #tpu.memory_space<vmem>>, vector<4x128xf32>
    %2 = vector.extract_strided_slice %0 {offsets = [0, 0], sizes = [1, 256], strides = [1, 1]} : vector<3x256xf32> to vector<1x256xf32>
    %3 = vector.extract_strided_slice %0 {offsets = [1, 0], sizes = [1, 256], strides = [1, 1]} : vector<3x256xf32> to vector<1x256xf32>
    %4 = vector.extract_strided_slice %0 {offsets = [2, 0], sizes = [1, 256], strides = [1, 1]} : vector<3x256xf32> to vector<1x256xf32>
    %5 = vector.extract_strided_slice %1 {offsets = [0, 0], sizes = [1, 128], strides = [1, 1]} : vector<4x128xf32> to vector<1x128xf32>
    %6 = vector.extract_strided_slice %1 {offsets = [1, 0], sizes = [1, 128], strides = [1, 1]} : vector<4x128xf32> to vector<1x128xf32>
    %7 = vector.extract_strided_slice %1 {offsets = [2, 0], sizes = [1, 128], strides = [1, 1]} : vector<4x128xf32> to vector<1x128xf32>
    %8 = vector.extract_strided_slice %1 {offsets = [3, 0], sizes = [1, 128], strides = [1, 1]} : vector<4x128xf32> to vector<1x128xf32>
    %c0_3 = arith.constant 0 : index
    %c0_4 = arith.constant 0 : index
    %9 = vector.load %arg0[%c0_3, %c0_4] : memref<8x784xf32, #tpu.memory_space<vmem>>, vector<8x784xf32>
    %c0_5 = arith.constant 0 : index
    %c0_6 = arith.constant 0 : index
    %10 = vector.load %arg1[%c0_5, %c0_6] : memref<784x256xf32, #tpu.memory_space<vmem>>, vector<784x256xf32>
    %cst = arith.constant dense<0.000000e+00> : vector<8x256xf32>
    %11 = tpu.matmul %9, %10, %cst {dimension_numbers = #tpu.dot_dimension_numbers<[1], [0], [0], [1], [0, 0, 1, 1], [], []>} : vector<8x784xf32>, vector<784x256xf32>, vector<8x256xf32> -> vector<8x256xf32>
    %12 = vector.broadcast %2 : vector<1x256xf32> to vector<8x256xf32>
    %13 = arith.addf %11, %12 : vector<8x256xf32>
    %cst_7 = arith.constant 0.000000e+00 : f32
    %14 = vector.broadcast %cst_7 : f32 to vector<8x256xf32>
    %15 = arith.maximumf %13, %14 : vector<8x256xf32>
    %cst_8 = arith.constant dense<0.000000e+00> : vector<256xf32>
    %16 = vector.multi_reduction <add>, %15, %cst_8 [0] : vector<8x256xf32> to vector<256xf32>
    %17 = vector.shape_cast %16 : vector<256xf32> to vector<1x256xf32>
    %18 = arith.mulf %15, %15 : vector<8x256xf32>
    %cst_9 = arith.constant dense<0.000000e+00> : vector<256xf32>
    %19 = vector.multi_reduction <add>, %18, %cst_9 [0] : vector<8x256xf32> to vector<256xf32>
    %20 = vector.shape_cast %19 : vector<256xf32> to vector<1x256xf32>
    %cst_10 = arith.constant 1.250000e-01 : f32
    %21 = vector.broadcast %cst_10 : f32 to vector<1x256xf32>
    %22 = arith.mulf %17, %21 : vector<1x256xf32>
    %cst_11 = arith.constant 1.250000e-01 : f32
    %23 = vector.broadcast %cst_11 : f32 to vector<1x256xf32>
    %24 = arith.mulf %20, %23 : vector<1x256xf32>
    %25 = arith.mulf %22, %22 : vector<1x256xf32>
    %26 = arith.subf %24, %25 : vector<1x256xf32>
    %cst_12 = arith.constant 0.000000e+00 : f32
    %27 = vector.broadcast %cst_12 : f32 to vector<1x256xf32>
    %28 = arith.maximumf %26, %27 : vector<1x256xf32>
    %cst_13 = arith.constant 9.99999974E-6 : f32
    %29 = vector.broadcast %cst_13 : f32 to vector<1x256xf32>
    %30 = arith.addf %28, %29 : vector<1x256xf32>
    %31 = math.rsqrt %30 : vector<1x256xf32>
    %32 = arith.mulf %3, %31 : vector<1x256xf32>
    %33 = arith.mulf %22, %32 : vector<1x256xf32>
    %34 = arith.subf %4, %33 : vector<1x256xf32>
    %35 = vector.broadcast %32 : vector<1x256xf32> to vector<8x256xf32>
    %36 = arith.mulf %15, %35 : vector<8x256xf32>
    %37 = vector.broadcast %34 : vector<1x256xf32> to vector<8x256xf32>
    %38 = arith.addf %36, %37 : vector<8x256xf32>
    %c0_14 = arith.constant 0 : index
    %c0_15 = arith.constant 0 : index
    %39 = vector.load %arg3[%c0_14, %c0_15] : memref<256x128xf32, #tpu.memory_space<vmem>>, vector<256x128xf32>
    %cst_16 = arith.constant dense<0.000000e+00> : vector<8x128xf32>
    %40 = tpu.matmul %38, %39, %cst_16 {dimension_numbers = #tpu.dot_dimension_numbers<[1], [0], [0], [1], [0, 0, 1, 1], [], []>} : vector<8x256xf32>, vector<256x128xf32>, vector<8x128xf32> -> vector<8x128xf32>
    %41 = vector.broadcast %5 : vector<1x128xf32> to vector<8x128xf32>
    %42 = arith.addf %40, %41 : vector<8x128xf32>
    %cst_17 = arith.constant 0.000000e+00 : f32
    %43 = vector.broadcast %cst_17 : f32 to vector<8x128xf32>
    %44 = arith.maximumf %42, %43 : vector<8x128xf32>
    %cst_18 = arith.constant dense<0.000000e+00> : vector<128xf32>
    %45 = vector.multi_reduction <add>, %44, %cst_18 [0] : vector<8x128xf32> to vector<128xf32>
    %46 = vector.shape_cast %45 : vector<128xf32> to vector<1x128xf32>
    %47 = arith.mulf %44, %44 : vector<8x128xf32>
    %cst_19 = arith.constant dense<0.000000e+00> : vector<128xf32>
    %48 = vector.multi_reduction <add>, %47, %cst_19 [0] : vector<8x128xf32> to vector<128xf32>
    %49 = vector.shape_cast %48 : vector<128xf32> to vector<1x128xf32>
    %cst_20 = arith.constant 1.250000e-01 : f32
    %50 = vector.broadcast %cst_20 : f32 to vector<1x128xf32>
    %51 = arith.mulf %46, %50 : vector<1x128xf32>
    %cst_21 = arith.constant 1.250000e-01 : f32
    %52 = vector.broadcast %cst_21 : f32 to vector<1x128xf32>
    %53 = arith.mulf %49, %52 : vector<1x128xf32>
    %54 = arith.mulf %51, %51 : vector<1x128xf32>
    %55 = arith.subf %53, %54 : vector<1x128xf32>
    %cst_22 = arith.constant 0.000000e+00 : f32
    %56 = vector.broadcast %cst_22 : f32 to vector<1x128xf32>
    %57 = arith.maximumf %55, %56 : vector<1x128xf32>
    %cst_23 = arith.constant 9.99999974E-6 : f32
    %58 = vector.broadcast %cst_23 : f32 to vector<1x128xf32>
    %59 = arith.addf %57, %58 : vector<1x128xf32>
    %60 = math.rsqrt %59 : vector<1x128xf32>
    %61 = arith.mulf %6, %60 : vector<1x128xf32>
    %62 = arith.mulf %51, %61 : vector<1x128xf32>
    %63 = arith.subf %7, %62 : vector<1x128xf32>
    %64 = vector.broadcast %61 : vector<1x128xf32> to vector<8x128xf32>
    %65 = arith.mulf %44, %64 : vector<8x128xf32>
    %66 = vector.broadcast %63 : vector<1x128xf32> to vector<8x128xf32>
    %67 = arith.addf %65, %66 : vector<8x128xf32>
    %c0_24 = arith.constant 0 : index
    %c0_25 = arith.constant 0 : index
    %68 = vector.load %arg4[%c0_24, %c0_25] : memref<128x128xf32, #tpu.memory_space<vmem>>, vector<128x128xf32>
    %cst_26 = arith.constant dense<0.000000e+00> : vector<8x128xf32>
    %69 = tpu.matmul %67, %68, %cst_26 {dimension_numbers = #tpu.dot_dimension_numbers<[1], [0], [0], [1], [0, 0, 1, 1], [], []>} : vector<8x128xf32>, vector<128x128xf32>, vector<8x128xf32> -> vector<8x128xf32>
    %70 = vector.broadcast %8 : vector<1x128xf32> to vector<8x128xf32>
    %71 = arith.addf %69, %70 : vector<8x128xf32>
    %c0_27 = arith.constant 0 : index
    %c0_28 = arith.constant 0 : index
    %72 = vector.load %arg6[%c0_27, %c0_28] : memref<8x128xf32, #tpu.memory_space<vmem>>, vector<8x128xf32>
    tpu.vector_store %arg6[%c0_27, %c0_28], %71 {strides = array<i32>} : memref<8x128xf32, #tpu.memory_space<vmem>>, vector<8x128xf32>,
    return
  }
}

</mosaic_0001>

<llo_original>
// kernel: tpu_custom_call.1
$region0: #{tpu_custom_call.1}
  #allocation0 [shape = 'u32[]', space=smem, size = 0x4, offset = 0x4, fixed_abs, tag = 'smem constant byte address 0x4 - core index']
  #allocation1 [shape = 'u32[144,128]{1,0:T(1,128)}', space=vmem, size = 0x12000, scoped, tag = 'internal scratch']
  %s0 = inlined_call_operand.hbm [shape: f32[8,784], index: 0, kind: input, shape index: {}]
  %s1 = inlined_call_operand.hbm [shape: f32[784,256], index: 1, kind: input, shape index: {}]
  %s2 = inlined_call_operand.hbm [shape: f32[3,256], index: 2, kind: input, shape index: {}]
  %s3 = inlined_call_operand.hbm [shape: f32[256,128], index: 3, kind: input, shape index: {}]
  %s4 = inlined_call_operand.hbm [shape: f32[128,128], index: 4, kind: input, shape index: {}]
  %s5 = inlined_call_operand.vmem [shape: f32[4,128], index: 5, kind: input, shape index: {}]
  %s6 = inlined_call_operand.hbm [shape: f32[8,128], index: 6, kind: output, shape index: {}]
  %s7 = sld [smem:[#allocation0]]
  $region54: #{tpu_custom_call.1} parent=0
    _
  %s9 = ssub.s32 1, %s7
  %s10 = scalar_select 0, %s9, %s7
  $region1: #{tpu_custom_call.1} parent=0
    #allocation2 [shape = 'u8[28672]{0}', space=vmem, size = 0x7000, scoped, tag = 'input window, operand 0, single buffered']
    #allocation3 [shape = 's32[1]{0}', space=sflag, size = 0x4, scoped, tag = 'scoped memory for tpu_custom_call.1']
    #allocation4 [shape = 's32[1]{0}', space=sflag, size = 0x4, scoped, tag = 'scoped memory for tpu_custom_call.1']
    #allocation5 [shape = 'u8[802816]{0}', space=vmem, size = 0xc4000, scoped, tag = 'input window, operand 1, single buffered']
    #allocation6 [shape = 's32[1]{0}', space=sflag, size = 0x4, scoped, tag = 'scoped memory for tpu_custom_call.1']
    #allocation7 [shape = 'u8[4096]{0}', space=vmem, size = 0x1000, scoped, tag = 'input window, operand 2, single buffered']
    #allocation8 [shape = 'u8[131072]{0}', space=vmem, size = 0x20000, scoped, tag = 'input window, operand 3, single buffered']
    #allocation9 [shape = 's32[1]{0}', space=sflag, size = 0x4, scoped, tag = 'scoped memory for tpu_custom_call.1']
    #allocation10 [shape = 'u8[65536]{0}', space=vmem, size = 0x10000, scoped, tag = 'input window, operand 4, single buffered']
    #allocation11 [shape = 'u8[4096]{0}', space=vmem, size = 0x1000, scoped, tag = 'output window, operand 0, single buffered']
    %11 = vsyncpa [#allocation3], 0
    %12 = vsyncpa [#allocation6], 0
    %13 = vsyncpa [#allocation9], 0
    %14 = vsyncpa [#allocation4], 0
    // Predicated region
    $region2: #{tpu_custom_call.1} parent=1 // pred_check
      _
    $region3: #{tpu_custom_call.1} parent=1 // pred_check_branch
      %16 = sbr.rel (0) target = $region5
    $region4: #{tpu_custom_call.1} parent=1 // pred_region
      %s18 = ssub.s32 896, 896
      %19 = vsyncadd [#allocation3], %s18
      %s21 = sshll.u32 [#allocation2], 4
      %s22 = int_to_ptr.vmem [resolvable:$true] %s21
      %24 = dma.hbm_to_vmem [thread:$0]  %s0, 896, %s22, [#allocation3]
    $region5: #{tpu_custom_call.1} parent=1 // pred_fallthru
      _
    // Predicated region
    $region6: #{tpu_custom_call.1} parent=1 // pred_check
      _
    $region7: #{tpu_custom_call.1} parent=1 // pred_check_branch
      %26 = sbr.rel (0) target = $region9
    $region8: #{tpu_custom_call.1} parent=1 // pred_region
      %s28 = ssub.s32 25088, 25088
      %29 = vsyncadd [#allocation6], %s28
      %s30 = sshll.u32 [#allocation5], 4
      %s31 = int_to_ptr.vmem [resolvable:$true] %s30
      %36 = dma.hbm_to_vmem [thread:$0]  %s1, 25088, %s31, [#allocation6], 256, 256, 16
    $region9: #{tpu_custom_call.1} parent=1 // pred_fallthru
      _
    // Predicated region
    $region10: #{tpu_custom_call.1} parent=1 // pred_check
      _
    $region11: #{tpu_custom_call.1} parent=1 // pred_check_branch
      %38 = sbr.rel (0) target = $region13
    $region12: #{tpu_custom_call.1} parent=1 // pred_region
      %s40 = ssub.s32 128, 128
      %41 = vsyncadd [#allocation6], %s40
      %s43 = sshll.u32 [#allocation7], 4
      %s44 = int_to_ptr.vmem [resolvable:$true] %s43
      %46 = dma.hbm_to_vmem [thread:$0]  %s2, 128, %s44, [#allocation6]
    $region13: #{tpu_custom_call.1} parent=1 // pred_fallthru
      _
    // Predicated region
    $region14: #{tpu_custom_call.1} parent=1 // pred_check
      _
    $region15: #{tpu_custom_call.1} parent=1 // pred_check_branch
      %48 = sbr.rel (0) target = $region17
    $region16: #{tpu_custom_call.1} parent=1 // pred_region
      %s50 = ssub.s32 4096, 4096
      %51 = vsyncadd [#allocation9], %s50
      %s52 = sshll.u32 [#allocation8], 4
      %s53 = int_to_ptr.vmem [resolvable:$true] %s52
      %58 = dma.hbm_to_vmem [thread:$0]  %s3, 4096, %s53, [#allocation9], 128, 128, 8
    $region17: #{tpu_custom_call.1} parent=1 // pred_fallthru
      _
    // Predicated region
    $region18: #{tpu_custom_call.1} parent=1 // pred_check
      _
    $region19: #{tpu_custom_call.1} parent=1 // pred_check_branch
      %60 = sbr.rel (0) target = $region21
    $region20: #{tpu_custom_call.1} parent=1 // pred_region
      %s62 = ssub.s32 2048, 2048
      %63 = vsyncadd [#allocation9], %s62
      %s64 = sshll.u32 [#allocation10], 4
      %s65 = int_to_ptr.vmem [resolvable:$true] %s64
      %70 = dma.hbm_to_vmem [thread:$0]  %s4, 2048, %s65, [#allocation9], 128, 128, 8
    $region21: #{tpu_custom_call.1} parent=1 // pred_fallthru
      _
    // Predicated region
    $region22: #{tpu_custom_call.1} parent=1 // pred_check
      _
    $region23: #{tpu_custom_call.1} parent=1 // pred_check_branch
      %72 = sbr.rel (0) target = $region25
    $region24: #{tpu_custom_call.1} parent=1 // pred_region
      _
    $region25: #{tpu_custom_call.1} parent=1 // pred_fallthru
      _
    // Predicated region
    $region26: #{tpu_custom_call.1} parent=1 // pred_check
      _
    $region27: #{tpu_custom_call.1} parent=1 // pred_check_branch
      %74 = sbr.rel (0) target = $region29
    $region28: #{tpu_custom_call.1} parent=1 // pred_region
      %75 = dma.done [#allocation3], 896
    $region29: #{tpu_custom_call.1} parent=1 // pred_fallthru
      _
    // Predicated region
    $region30: #{tpu_custom_call.1} parent=1 // pred_check
      _
    $region31: #{tpu_custom_call.1} parent=1 // pred_check_branch
      %77 = sbr.rel (0) target = $region33
    $region32: #{tpu_custom_call.1} parent=1 // pred_region
      %78 = dma.done [#allocation6], 25088
    $region33: #{tpu_custom_call.1} parent=1 // pred_fallthru
      _
    // Predicated region
    $region34: #{tpu_custom_call.1} parent=1 // pred_check
      _
    $region35: #{tpu_custom_call.1} parent=1 // pred_check_branch
      %80 = sbr.rel (0) target = $region37
    $region36: #{tpu_custom_call.1} parent=1 // pred_region
      %81 = dma.done [#allocation6], 128
    $region37: #{tpu_custom_call.1} parent=1 // pred_fallthru
      _
    // Predicated region
    $region38: #{tpu_custom_call.1} parent=1 // pred_check
      _
    $region39: #{tpu_custom_call.1} parent=1 // pred_check_branch
      %83 = sbr.rel (0) target = $region41
    $region40: #{tpu_custom_call.1} parent=1 // pred_region
      %84 = dma.done [#allocation9], 4096
    $region41: #{tpu_custom_call.1} parent=1 // pred_fallthru
      _
    // Predicated region
    $region42: #{tpu_custom_call.1} parent=1 // pred_check
      _
    $region43: #{tpu_custom_call.1} parent=1 // pred_check_branch
      %86 = sbr.rel (0) target = $region45
    $region44: #{tpu_custom_call.1} parent=1 // pred_region
      %87 = dma.done [#allocation9], 2048
    $region45: #{tpu_custom_call.1} parent=1 // pred_fallthru
      _
    %v88 = vld [vmem:[#allocation7] sm:$0x77]
    %v89 = vld [vmem:[%s5] sm:$0xf]
    %v90 = vld [vmem:[#allocation2] sm:$0xff]
    %v91 = vld [vmem:[#allocation2 + $0x8] sm:$0xff]
    %v92 = vld [vmem:[#allocation2 + $0x10] sm:$0xff]
    %v93 = vld [vmem:[#allocation2 + $0x18] sm:$0xff]
    %v94 = vld [vmem:[#allocation2 + $0x20] sm:$0xff]
    %v95 = vld [vmem:[#allocation2 + $0x28] sm:$0xff]
    %v96 = vld [vmem:[#allocation2 + $0x30] sm:$0xff]
    %v97 = vld [vmem:[#allocation5] sm:$0xff]
    %v98 = vld [vmem:[#allocation5 + $0x8] sm:$0xff]
    %v99 = vld [vmem:[#allocation5 + $0x10] sm:$0xff]
    %v100 = vld [vmem:[#allocation5 + $0x18] sm:$0xff]
    %v101 = vld [vmem:[#allocation5 + $0x20] sm:$0xff]
    %v102 = vld [vmem:[#allocation5 + $0x28] sm:$0xff]
    %v103 = vld [vmem:[#allocation5 + $0x30] sm:$0xff]
    %v104 = vld [vmem:[#allocation5 + $0x38] sm:$0xff]
    %v105 = vld [vmem:[#allocation5 + $0x40] sm:$0xff]
    %v106 = vld [vmem:[#allocation5 + $0x48] sm:$0xff]
    %v107 = vld [vmem:[#allocation5 + $0x50] sm:$0xff]
    %v108 = vld [vmem:[#allocation5 + $0x58] sm:$0xff]
    %v109 = vld [vmem:[#allocation5 + $0x60] sm:$0xff]
    %v110 = vld [vmem:[#allocation5 + $0x68] sm:$0xff]
    %v111 = vld [vmem:[#allocation5 + $0x70] sm:$0xff]
    %v112 = vld [vmem:[#allocation5 + $0x78] sm:$0xff]
    %v113 = vld [vmem:[#allocation5 + $0x80] sm:$0xff]
    %v114 = vld [vmem:[#allocation5 + $0x88] sm:$0xff]
    %v115 = vld [vmem:[#allocation5 + $0x90] sm:$0xff]
    %v116 = vld [vmem:[#allocation5 + $0x98] sm:$0xff]
    %v117 = vld [vmem:[#allocation5 + $0xa0] sm:$0xff]
    %v118 = vld [vmem:[#allocation5 + $0xa8] sm:$0xff]
    %v119 = vld [vmem:[#allocation5 + $0xb0] sm:$0xff]
    %v120 = vld [vmem:[#allocation5 + $0xb8] sm:$0xff]
    %v121 = vld [vmem:[#allocation5 + $0xc0] sm:$0xff]
    %v122 = vld [vmem:[#allocation5 + $0xc8] sm:$0xff]
    %v123 = vld [vmem:[#allocation5 + $0xd0] sm:$0xff]
    %v124 = vld [vmem:[#allocation5 + $0xd8] sm:$0xff]
    %v125 = vld [vmem:[#allocation5 + $0xe0] sm:$0xff]
    %v126 = vld [vmem:[#allocation5 + $0xe8] sm:$0xff]
    %v127 = vld [vmem:[#allocation5 + $0xf0] sm:$0xff]
    %v128 = vld [vmem:[#allocation5 + $0xf8] sm:$0xff]
    %v129 = vld [vmem:[#allocation5 + $0x100] sm:$0xff]
    %v130 = vld [vmem:[#allocation5 + $0x108] sm:$0xff]
    %v131 = vld [vmem:[#allocation5 + $0x110] sm:$0xff]
    %v132 = vld [vmem:[#allocation5 + $0x118] sm:$0xff]
    %v133 = vld [vmem:[#allocation5 + $0x120] sm:$0xff]
    %v134 = vld [vmem:[#allocation5 + $0x128] sm:$0xff]
    %v135 = vld [vmem:[#allocation5 + $0x130] sm:$0xff]
    %v136 = vld [vmem:[#allocation5 + $0x138] sm:$0xff]
    %v137 = vld [vmem:[#allocation5 + $0x140] sm:$0xff]
    %v138 = vld [vmem:[#allocation5 + $0x148] sm:$0xff]
    %v139 = vld [vmem:[#allocation5 + $0x150] sm:$0xff]
    %v140 = vld [vmem:[#allocation5 + $0x158] sm:$0xff]
    %v141 = vld [vmem:[#allocation5 + $0x160] sm:$0xff]
    %v142 = vld [vmem:[#allocation5 + $0x168] sm:$0xff]
    %v143 = vld [vmem:[#allocation5 + $0x170] sm:$0xff]
    %v144 = vld [vmem:[#allocation5 + $0x178] sm:$0xff]
    %v145 = vld [vmem:[#allocation5 + $0x180] sm:$0xff]
    %v146 = vld [vmem:[#allocation5 + $0x188] sm:$0xff]
    %v147 = vld [vmem:[#allocation5 + $0x190] sm:$0xff]
    %v148 = vld [vmem:[#allocation5 + $0x198] sm:$0xff]
    %v149 = vld [vmem:[#allocation5 + $0x1a0] sm:$0xff]
    %v150 = vld [vmem:[#allocation5 + $0x1a8] sm:$0xff]
    %v151 = vld [vmem:[#allocation5 + $0x1b0] sm:$0xff]
    %v152 = vld [vmem:[#allocation5 + $0x1b8] sm:$0xff]
    %v153 = vld [vmem:[#allocation5 + $0x1c0] sm:$0xff]
    %v154 = vld [vmem:[#allocation5 + $0x1c8] sm:$0xff]
    %v155 = vld [vmem:[#allocation5 + $0x1d0] sm:$0xff]
    %v156 = vld [vmem:[#allocation5 + $0x1d8] sm:$0xff]
    %v157 = vld [vmem:[#allocation5 + $0x1e0] sm:$0xff]
    %v158 = vld [vmem:[#allocation5 + $0x1e8] sm:$0xff]
    %v159 = vld [vmem:[#allocation5 + $0x1f0] sm:$0xff]
    %v160 = vld [vmem:[#allocation5 + $0x1f8] sm:$0xff]
    %v161 = vld [vmem:[#allocation5 + $0x200] sm:$0xff]
    %v162 = vld [vmem:[#allocation5 + $0x208] sm:$0xff]
    %v163 = vld [vmem:[#allocation5 + $0x210] sm:$0xff]
    %v164 = vld [vmem:[#allocation5 + $0x218] sm:$0xff]
    %v165 = vld [vmem:[#allocation5 + $0x220] sm:$0xff]
    %v166 = vld [vmem:[#allocation5 + $0x228] sm:$0xff]
    %v167 = vld [vmem:[#allocation5 + $0x230] sm:$0xff]
    %v168 = vld [vmem:[#allocation5 + $0x238] sm:$0xff]
    %v169 = vld [vmem:[#allocation5 + $0x240] sm:$0xff]
    %v170 = vld [vmem:[#allocation5 + $0x248] sm:$0xff]
    %v171 = vld [vmem:[#allocation5 + $0x250] sm:$0xff]
    %v172 = vld [vmem:[#allocation5 + $0x258] sm:$0xff]
    %v173 = vld [vmem:[#allocation5 + $0x260] sm:$0xff]
    %v174 = vld [vmem:[#allocation5 + $0x268] sm:$0xff]
    %v175 = vld [vmem:[#allocation5 + $0x270] sm:$0xff]
    %v176 = vld [vmem:[#allocation5 + $0x278] sm:$0xff]
    %v177 = vld [vmem:[#allocation5 + $0x280] sm:$0xff]
    %v178 = vld [vmem:[#allocation5 + $0x288] sm:$0xff]
    %v179 = vld [vmem:[#allocation5 + $0x290] sm:$0xff]
    %v180 = vld [vmem:[#allocation5 + $0x298] sm:$0xff]
    %v181 = vld [vmem:[#allocation5 + $0x2a0] sm:$0xff]
    %v182 = vld [vmem:[#allocation5 + $0x2a8] sm:$0xff]
    %v183 = vld [vmem:[#allocation5 + $0x2b0] sm:$0xff]
    %v184 = vld [vmem:[#allocation5 + $0x2b8] sm:$0xff]
    %v185 = vld [vmem:[#allocation5 + $0x2c0] sm:$0xff]
    %v186 = vld [vmem:[#allocation5 + $0x2c8] sm:$0xff]
    %v187 = vld [vmem:[#allocation5 + $0x2d0] sm:$0xff]
    %v188 = vld [vmem:[#allocation5 + $0x2d8] sm:$0xff]
    %v189 = vld [vmem:[#allocation5 + $0x2e0] sm:$0xff]
    %v190 = vld [vmem:[#allocation5 + $0x2e8] sm:$0xff]
    %v191 = vld [vmem:[#allocation5 + $0x2f0] sm:$0xff]
    %v192 = vld [vmem:[#allocation5 + $0x2f8] sm:$0xff]
    %v193 = vld [vmem:[#allocation5 + $0x300] sm:$0xff]
    %v194 = vld [vmem:[#allocation5 + $0x308] sm:$0xff]
    %v195 = vld [vmem:[#allocation5 + $0x310] sm:$0xff]
    %v196 = vld [vmem:[#allocation5 + $0x318] sm:$0xff]
    %v197 = vld [vmem:[#allocation5 + $0x320] sm:$0xff]
    %v198 = vld [vmem:[#allocation5 + $0x328] sm:$0xff]
    %v199 = vld [vmem:[#allocation5 + $0x330] sm:$0xff]
    %v200 = vld [vmem:[#allocation5 + $0x338] sm:$0xff]
    %v201 = vld [vmem:[#allocation5 + $0x340] sm:$0xff]
    %v202 = vld [vmem:[#allocation5 + $0x348] sm:$0xff]
    %v203 = vld [vmem:[#allocation5 + $0x350] sm:$0xff]
    %v204 = vld [vmem:[#allocation5 + $0x358] sm:$0xff]
    %v205 = vld [vmem:[#allocation5 + $0x360] sm:$0xff]
    %v206 = vld [vmem:[#allocation5 + $0x368] sm:$0xff]
    %v207 = vld [vmem:[#allocation5 + $0x370] sm:$0xff]
    %v208 = vld [vmem:[#allocation5 + $0x378] sm:$0xff]
    %v209 = vld [vmem:[#allocation5 + $0x380] sm:$0xff]
    %v210 = vld [vmem:[#allocation5 + $0x388] sm:$0xff]
    %v211 = vld [vmem:[#allocation5 + $0x390] sm:$0xff]
    %v212 = vld [vmem:[#allocation5 + $0x398] sm:$0xff]
    %v213 = vld [vmem:[#allocation5 + $0x3a0] sm:$0xff]
    %v214 = vld [vmem:[#allocation5 + $0x3a8] sm:$0xff]
    %v215 = vld [vmem:[#allocation5 + $0x3b0] sm:$0xff]
    %v216 = vld [vmem:[#allocation5 + $0x3b8] sm:$0xff]
    %v217 = vld [vmem:[#allocation5 + $0x3c0] sm:$0xff]
    %v218 = vld [vmem:[#allocation5 + $0x3c8] sm:$0xff]
    %v219 = vld [vmem:[#allocation5 + $0x3d0] sm:$0xff]
    %v220 = vld [vmem:[#allocation5 + $0x3d8] sm:$0xff]
    %v221 = vld [vmem:[#allocation5 + $0x3e0] sm:$0xff]
    %v222 = vld [vmem:[#allocation5 + $0x3e8] sm:$0xff]
    %v223 = vld [vmem:[#allocation5 + $0x3f0] sm:$0xff]
    %v224 = vld [vmem:[#allocation5 + $0x3f8] sm:$0xff]
    %v225 = vld [vmem:[#allocation5 + $0x400] sm:$0xff]
    %v226 = vld [vmem:[#allocation5 + $0x408] sm:$0xff]
    %v227 = vld [vmem:[#allocation5 + $0x410] sm:$0xff]
    %v228 = vld [vmem:[#allocation5 + $0x418] sm:$0xff]
    %v229 = vld [vmem:[#allocation5 + $0x420] sm:$0xff]
    %v230 = vld [vmem:[#allocation5 + $0x428] sm:$0xff]
    %v231 = vld [vmem:[#allocation5 + $0x430] sm:$0xff]
    %v232 = vld [vmem:[#allocation5 + $0x438] sm:$0xff]
    %v233 = vld [vmem:[#allocation5 + $0x440] sm:$0xff]
    %v234 = vld [vmem:[#allocation5 + $0x448] sm:$0xff]
    %v235 = vld [vmem:[#allocation5 + $0x450] sm:$0xff]
    %v236 = vld [vmem:[#allocation5 + $0x458] sm:$0xff]
    %v237 = vld [vmem:[#allocation5 + $0x460] sm:$0xff]
    %v238 = vld [vmem:[#allocation5 + $0x468] sm:$0xff]
    %v239 = vld [vmem:[#allocation5 + $0x470] sm:$0xff]
    %v240 = vld [vmem:[#allocation5 + $0x478] sm:$0xff]
    %v241 = vld [vmem:[#allocation5 + $0x480] sm:$0xff]
    %v242 = vld [vmem:[#allocation5 + $0x488] sm:$0xff]
    %v243 = vld [vmem:[#allocation5 + $0x490] sm:$0xff]
    %v244 = vld [vmem:[#allocation5 + $0x498] sm:$0xff]
    %v245 = vld [vmem:[#allocation5 + $0x4a0] sm:$0xff]
    %v246 = vld [vmem:[#allocation5 + $0x4a8] sm:$0xff]
    %v247 = vld [vmem:[#allocation5 + $0x4b0] sm:$0xff]
    %v248 = vld [vmem:[#allocation5 + $0x4b8] sm:$0xff]
    %v249 = vld [vmem:[#allocation5 + $0x4c0] sm:$0xff]
    %v250 = vld [vmem:[#allocation5 + $0x4c8] sm:$0xff]
    %v251 = vld [vmem:[#allocation5 + $0x4d0] sm:$0xff]
    %v252 = vld [vmem:[#allocation5 + $0x4d8] sm:$0xff]
    %v253 = vld [vmem:[#allocation5 + $0x4e0] sm:$0xff]
    %v254 = vld [vmem:[#allocation5 + $0x4e8] sm:$0xff]
    %v255 = vld [vmem:[#allocation5 + $0x4f0] sm:$0xff]
    %v256 = vld [vmem:[#allocation5 + $0x4f8] sm:$0xff]
    %v257 = vld [vmem:[#allocation5 + $0x500] sm:$0xff]
    %v258 = vld [vmem:[#allocation5 + $0x508] sm:$0xff]
    %v259 = vld [vmem:[#allocation5 + $0x510] sm:$0xff]
    %v260 = vld [vmem:[#allocation5 + $0x518] sm:$0xff]
    %v261 = vld [vmem:[#allocation5 + $0x520] sm:$0xff]
    %v262 = vld [vmem:[#allocation5 + $0x528] sm:$0xff]
    %v263 = vld [vmem:[#allocation5 + $0x530] sm:$0xff]
    %v264 = vld [vmem:[#allocation5 + $0x538] sm:$0xff]
    %v265 = vld [vmem:[#allocation5 + $0x540] sm:$0xff]
    %v266 = vld [vmem:[#allocation5 + $0x548] sm:$0xff]
    %v267 = vld [vmem:[#allocation5 + $0x550] sm:$0xff]
    %v268 = vld [vmem:[#allocation5 + $0x558] sm:$0xff]
    %v269 = vld [vmem:[#allocation5 + $0x560] sm:$0xff]
    %v270 = vld [vmem:[#allocation5 + $0x568] sm:$0xff]
    %v271 = vld [vmem:[#allocation5 + $0x570] sm:$0xff]
    %v272 = vld [vmem:[#allocation5 + $0x578] sm:$0xff]
    %v273 = vld [vmem:[#allocation5 + $0x580] sm:$0xff]
    %v274 = vld [vmem:[#allocation5 + $0x588] sm:$0xff]
    %v275 = vld [vmem:[#allocation5 + $0x590] sm:$0xff]
    %v276 = vld [vmem:[#allocation5 + $0x598] sm:$0xff]
    %v277 = vld [vmem:[#allocation5 + $0x5a0] sm:$0xff]
    %v278 = vld [vmem:[#allocation5 + $0x5a8] sm:$0xff]
    %v279 = vld [vmem:[#allocation5 + $0x5b0] sm:$0xff]
    %v280 = vld [vmem:[#allocation5 + $0x5b8] sm:$0xff]
    %v281 = vld [vmem:[#allocation5 + $0x5c0] sm:$0xff]
    %v282 = vld [vmem:[#allocation5 + $0x5c8] sm:$0xff]
    %v283 = vld [vmem:[#allocation5 + $0x5d0] sm:$0xff]
    %v284 = vld [vmem:[#allocation5 + $0x5d8] sm:$0xff]
    %v285 = vld [vmem:[#allocation5 + $0x5e0] sm:$0xff]
    %v286 = vld [vmem:[#allocation5 + $0x5e8] sm:$0xff]
    %v287 = vld [vmem:[#allocation5 + $0x5f0] sm:$0xff]
    %v288 = vld [vmem:[#allocation5 + $0x5f8] sm:$0xff]
    %v289 = vld [vmem:[#allocation5 + $0x600] sm:$0xff]
    %v290 = vld [vmem:[#allocation5 + $0x608] sm:$0xff]
    %v291 = vld [vmem:[#allocation5 + $0x610] sm:$0xff]
    %v292 = vld [vmem:[#allocation5 + $0x618] sm:$0xff]
    %v294 = vlaneseq
    %v295 = vshrl.u32 %v294, 7
    %v296 = vsub.s32 0, %v295
    %v297 = vrot.slane %v88, %v296
    %v298 = vlaneseq
    %v299 = vshrl.u32 %v298, 7
    %v300 = vsub.s32 4, %v299
    %v301 = vrot.slane %v88, %v300
    %v304 = vlaneseq
    %v305 = vshrl.u32 %v304, 7
    %v306 = vsub.s32 0, %v305
    %v307 = vrot.slane %v297, %v306
    %v308 = vlaneseq
    %v309 = vshrl.u32 %v308, 7
    %v310 = vsub.s32 0, %v309
    %v311 = vrot.slane %v301, %v310
    %vm312 = vcmask 130048
    %v314 = vsel %vm312, %v96, 0
    %316 = vmatprep.subr.mxu0 %v128
    %317 = vmatpush1.msra.mxu0 %v127
    %318 = vmatprep.subr.mxu0 %v126
    %319 = vmatpush1.msra.mxu0 %v125
    %320 = vmatprep.subr.mxu0 %v124
    %321 = vmatpush1.msra.mxu0 %v123
    %322 = vmatprep.subr.mxu0 %v122
    %323 = vmatpush1.msra.mxu0 %v121
    %324 = vmatprep.subr.mxu0 %v120
    %325 = vmatpush1.msra.mxu0 %v119
    %326 = vmatprep.subr.mxu0 %v118
    %327 = vmatpush1.msra.mxu0 %v117
    %328 = vmatprep.subr.mxu0 %v116
    %329 = vmatpush1.msra.mxu0 %v115
    %330 = vmatprep.subr.mxu0 %v114
    %331 = vmatpush1.msra.mxu0 %v113
    %332 = vmatprep.subr.mxu0 %v112
    %333 = vmatpush1.msra.mxu0 %v111
    %334 = vmatprep.subr.mxu0 %v110
    %335 = vmatpush1.msra.mxu0 %v109
    %336 = vmatprep.subr.mxu0 %v108
    %337 = vmatpush1.msra.mxu0 %v107
    %338 = vmatprep.subr.mxu0 %v106
    %339 = vmatpush1.msra.mxu0 %v105
    %340 = vmatprep.subr.mxu0 %v104
    %341 = vmatpush1.msra.mxu0 %v103
    %342 = vmatprep.subr.mxu0 %v102
    %343 = vmatpush1.msra.mxu0 %v101
    %344 = vmatprep.subr.mxu0 %v100
    %345 = vmatpush1.msra.mxu0 %v99
    %346 = vmatprep.subr.mxu0 %v98
    %347 = vmatpush1.msra.mxu0 %v97
    %348 = vmatprep.subr.mxu0 %v160
    %349 = vmatpush2.msra.mxu0 %v159
    %350 = vmatprep.subr.mxu0 %v158
    %351 = vmatpush2.msra.mxu0 %v157
    %352 = vmatprep.subr.mxu0 %v156
    %353 = vmatpush2.msra.mxu0 %v155
    %354 = vmatprep.subr.mxu0 %v154
    %355 = vmatpush2.msra.mxu0 %v153
    %356 = vmatprep.subr.mxu0 %v152
    %357 = vmatpush2.msra.mxu0 %v151
    %358 = vmatprep.subr.mxu0 %v150
    %359 = vmatpush2.msra.mxu0 %v149
    %360 = vmatprep.subr.mxu0 %v148
    %361 = vmatpush2.msra.mxu0 %v147
    %362 = vmatprep.subr.mxu0 %v146
    %363 = vmatpush2.msra.mxu0 %v145
    %364 = vmatprep.subr.mxu0 %v144
    %365 = vmatpush2.msra.mxu0 %v143
    %366 = vmatprep.subr.mxu0 %v142
    %367 = vmatpush2.msra.mxu0 %v141
    %368 = vmatprep.subr.mxu0 %v140
    %369 = vmatpush2.msra.mxu0 %v139
    %370 = vmatprep.subr.mxu0 %v138
    %371 = vmatpush2.msra.mxu0 %v137
    %372 = vmatprep.subr.mxu0 %v136
    %373 = vmatpush2.msra.mxu0 %v135
    %374 = vmatprep.subr.mxu0 %v134
    %375 = vmatpush2.msra.mxu0 %v133
    %376 = vmatprep.subr.mxu0 %v132
    %377 = vmatpush2.msra.mxu0 %v131
    %378 = vmatprep.subr.mxu0 %v130
    %379 = vmatpush2.msra.mxu0 %v129
    %380 = vmatprep.mubr.f32.mxu0 %v91
    %381 = vmatmul.mubr.f32.gmra.mxu0 %v90
    %v382 = vpop.f32.mrf.mxu0
    %v383 = vadd.f32 %v307, %v382
    %v384 = vpop.f32.mrf.mxu0
    %v385 = vadd.f32 %v311, %v384
    %386 = vdwg.mxu0
    %387 = vmatprep.subr.mxu0 %v192
    %388 = vmatpush1.msra.mxu0 %v191
    %389 = vmatprep.subr.mxu0 %v190
    %390 = vmatpush1.msra.mxu0 %v189
    %391 = vmatprep.subr.mxu0 %v188
    %392 = vmatpush1.msra.mxu0 %v187
    %393 = vmatprep.subr.mxu0 %v186
    %394 = vmatpush1.msra.mxu0 %v185
    %395 = vmatprep.subr.mxu0 %v184
    %396 = vmatpush1.msra.mxu0 %v183
    %397 = vmatprep.subr.mxu0 %v182
    %398 = vmatpush1.msra.mxu0 %v181
    %399 = vmatprep.subr.mxu0 %v180
    %400 = vmatpush1.msra.mxu0 %v179
    %401 = vmatprep.subr.mxu0 %v178
    %402 = vmatpush1.msra.mxu0 %v177
    %403 = vmatprep.subr.mxu0 %v176
    %404 = vmatpush1.msra.mxu0 %v175
    %405 = vmatprep.subr.mxu0 %v174
    %406 = vmatpush1.msra.mxu0 %v173
    %407 = vmatprep.subr.mxu0 %v172
    %408 = vmatpush1.msra.mxu0 %v171
    %409 = vmatprep.subr.mxu0 %v170
    %410 = vmatpush1.msra.mxu0 %v169
    %411 = vmatprep.subr.mxu0 %v168
    %412 = vmatpush1.msra.mxu0 %v167
    %413 = vmatprep.subr.mxu0 %v166
    %414 = vmatpush1.msra.mxu0 %v165
    %415 = vmatprep.subr.mxu0 %v164
    %416 = vmatpush1.msra.mxu0 %v163
    %417 = vmatprep.subr.mxu0 %v162
    %418 = vmatpush1.msra.mxu0 %v161
    %419 = vmatprep.subr.mxu0 %v224
    %420 = vmatpush2.msra.mxu0 %v223
    %421 = vmatprep.subr.mxu0 %v222
    %422 = vmatpush2.msra.mxu0 %v221
    %423 = vmatprep.subr.mxu0 %v220
    %424 = vmatpush2.msra.mxu0 %v219
    %425 = vmatprep.subr.mxu0 %v218
    %426 = vmatpush2.msra.mxu0 %v217
    %427 = vmatprep.subr.mxu0 %v216
    %428 = vmatpush2.msra.mxu0 %v215
    %429 = vmatprep.subr.mxu0 %v214
    %430 = vmatpush2.msra.mxu0 %v213
    %431 = vmatprep.subr.mxu0 %v212
    %432 = vmatpush2.msra.mxu0 %v211
    %433 = vmatprep.subr.mxu0 %v210
    %434 = vmatpush2.msra.mxu0 %v209
    %435 = vmatprep.subr.mxu0 %v208
    %436 = vmatpush2.msra.mxu0 %v207
    %437 = vmatprep.subr.mxu0 %v206
    %438 = vmatpush2.msra.mxu0 %v205
    %439 = vmatprep.subr.mxu0 %v204
    %440 = vmatpush2.msra.mxu0 %v203
    %441 = vmatprep.subr.mxu0 %v202
    %442 = vmatpush2.msra.mxu0 %v201
    %443 = vmatprep.subr.mxu0 %v200
    %444 = vmatpush2.msra.mxu0 %v199
    %445 = vmatprep.subr.mxu0 %v198
    %446 = vmatpush2.msra.mxu0 %v197
    %447 = vmatprep.subr.mxu0 %v196
    %448 = vmatpush2.msra.mxu0 %v195
    %449 = vmatprep.subr.mxu0 %v194
    %450 = vmatpush2.msra.mxu0 %v193
    %451 = vmatprep.mubr.f32.mxu0 %v93
    %452 = vmatmul.mubr.f32.gmra.mxu0 %v92
    %v453 = vpop.f32.mrf.mxu0
    %v454 = vadd.f32 %v383, %v453
    %v455 = vpop.f32.mrf.mxu0
    %v456 = vadd.f32 %v385, %v455
    %457 = vdwg.mxu0
    %458 = vmatprep.subr.mxu0 %v256
    %459 = vmatpush1.msra.mxu0 %v255
    %460 = vmatprep.subr.mxu0 %v254
    %461 = vmatpush1.msra.mxu0 %v253
    %462 = vmatprep.subr.mxu0 %v252
    %463 = vmatpush1.msra.mxu0 %v251
    %464 = vmatprep.subr.mxu0 %v250
    %465 = vmatpush1.msra.mxu0 %v249
    %466 = vmatprep.subr.mxu0 %v248
    %467 = vmatpush1.msra.mxu0 %v247
    %468 = vmatprep.subr.mxu0 %v246
    %469 = vmatpush1.msra.mxu0 %v245
    %470 = vmatprep.subr.mxu0 %v244
    %471 = vmatpush1.msra.mxu0 %v243
    %472 = vmatprep.subr.mxu0 %v242
    %473 = vmatpush1.msra.mxu0 %v241
    %474 = vmatprep.subr.mxu0 %v240
    %475 = vmatpush1.msra.mxu0 %v239
    %476 = vmatprep.subr.mxu0 %v238
    %477 = vmatpush1.msra.mxu0 %v237
    %478 = vmatprep.subr.mxu0 %v236
    %479 = vmatpush1.msra.mxu0 %v235
    %480 = vmatprep.subr.mxu0 %v234
    %481 = vmatpush1.msra.mxu0 %v233
    %482 = vmatprep.subr.mxu0 %v232
    %483 = vmatpush1.msra.mxu0 %v231
    %484 = vmatprep.subr.mxu0 %v230
    %485 = vmatpush1.msra.mxu0 %v229
    %486 = vmatprep.subr.mxu0 %v228
    %487 = vmatpush1.msra.mxu0 %v227
    %488 = vmatprep.subr.mxu0 %v226
    %489 = vmatpush1.msra.mxu0 %v225
    %490 = vmatprep.subr.mxu0 %v288
    %491 = vmatpush2.msra.mxu0 %v287
    %492 = vmatprep.subr.mxu0 %v286
    %493 = vmatpush2.msra.mxu0 %v285
    %494 = vmatprep.subr.mxu0 %v284
    %495 = vmatpush2.msra.mxu0 %v283
    %496 = vmatprep.subr.mxu0 %v282
    %497 = vmatpush2.msra.mxu0 %v281
    %498 = vmatprep.subr.mxu0 %v280
    %499 = vmatpush2.msra.mxu0 %v279
    %500 = vmatprep.subr.mxu0 %v278
    %501 = vmatpush2.msra.mxu0 %v277
    %502 = vmatprep.subr.mxu0 %v276
    %503 = vmatpush2.msra.mxu0 %v275
    %504 = vmatprep.subr.mxu0 %v274
    %505 = vmatpush2.msra.mxu0 %v273
    %506 = vmatprep.subr.mxu0 %v272
    %507 = vmatpush2.msra.mxu0 %v271
    %508 = vmatprep.subr.mxu0 %v270
    %509 = vmatpush2.msra.mxu0 %v269
    %510 = vmatprep.subr.mxu0 %v268
    %511 = vmatpush2.msra.mxu0 %v267
    %512 = vmatprep.subr.mxu0 %v266
    %513 = vmatpush2.msra.mxu0 %v265
    %514 = vmatprep.subr.mxu0 %v264
    %515 = vmatpush2.msra.mxu0 %v263
    %516 = vmatprep.subr.mxu0 %v262
    %517 = vmatpush2.msra.mxu0 %v261
    %518 = vmatprep.subr.mxu0 %v260
    %519 = vmatpush2.msra.mxu0 %v259
    %520 = vmatprep.subr.mxu0 %v258
    %521 = vmatpush2.msra.mxu0 %v257
    %522 = vmatprep.mubr.f32.mxu0 %v95
    %523 = vmatmul.mubr.f32.gmra.mxu0 %v94
    %v524 = vpop.f32.mrf.mxu0
    %v525 = vadd.f32 %v454, %v524
    %v526 = vpop.f32.mrf.mxu0
    %v527 = vadd.f32 %v456, %v526
    %528 = vdwg.mxu0
    %529 = vmatprep.subr.mxu0 0.0
    %530 = vmatpush1.msra.mxu0 0.0
    %531 = vmatprep.subr.mxu0 0.0
    %532 = vmatpush1.msra.mxu0 0.0
    %533 = vmatprep.subr.mxu0 0.0
    %534 = vmatpush1.msra.mxu0 0.0
    %535 = vmatprep.subr.mxu0 0.0
    %536 = vmatpush1.msra.mxu0 0.0
    %537 = vmatprep.subr.mxu0 0.0
    %538 = vmatpush1.msra.mxu0 0.0
    %539 = vmatprep.subr.mxu0 0.0
    %540 = vmatpush1.msra.mxu0 0.0
    %541 = vmatprep.subr.mxu0 0.0
    %542 = vmatpush1.msra.mxu0 0.0
    %543 = vmatprep.subr.mxu0 0.0
    %544 = vmatpush1.msra.mxu0 0.0
    %545 = vmatprep.subr.mxu0 0.0
    %546 = vmatpush1.msra.mxu0 0.0
    %547 = vmatprep.subr.mxu0 0.0
    %548 = vmatpush1.msra.mxu0 0.0
    %549 = vmatprep.subr.mxu0 0.0
    %550 = vmatpush1.msra.mxu0 0.0
    %551 = vmatprep.subr.mxu0 0.0
    %552 = vmatpush1.msra.mxu0 0.0
    %553 = vmatprep.subr.mxu0 0.0
    %554 = vmatpush1.msra.mxu0 0.0
    %555 = vmatprep.subr.mxu0 0.0
    %556 = vmatpush1.msra.mxu0 0.0
    %557 = vmatprep.subr.mxu0 %v292
    %558 = vmatpush1.msra.mxu0 %v291
    %559 = vmatprep.subr.mxu0 %v290
    %560 = vmatpush1.msra.mxu0 %v289
    %561 = vmatprep.subr.mxu0 0.0
    %562 = vmatpush2.msra.mxu0 0.0
    %563 = vmatprep.subr.mxu0 0.0
    %564 = vmatpush2.msra.mxu0 0.0
    %565 = vmatprep.subr.mxu0 0.0
    %566 = vmatpush2.msra.mxu0 0.0
    %567 = vmatprep.subr.mxu0 0.0
    %568 = vmatpush2.msra.mxu0 0.0
    %569 = vmatprep.subr.mxu0 0.0
    %570 = vmatpush2.msra.mxu0 0.0
    %571 = vmatprep.subr.mxu0 0.0
    %572 = vmatpush2.msra.mxu0 0.0
    %573 = vmatprep.subr.mxu0 0.0
    %574 = vmatpush2.msra.mxu0 0.0
    %575 = vmatprep.subr.mxu0 0.0
    %576 = vmatpush2.msra.mxu0 0.0
    %577 = vmatprep.subr.mxu0 0.0
    %578 = vmatpush2.msra.mxu0 0.0
    %579 = vmatprep.subr.mxu0 0.0
    %580 = vmatpush2.msra.mxu0 0.0
    %581 = vmatprep.subr.mxu0 0.0
    %582 = vmatpush2.msra.mxu0 0.0
    %583 = vmatprep.subr.mxu0 0.0
    %584 = vmatpush2.msra.mxu0 0.0
    %585 = vmatprep.subr.mxu0 0.0
    %586 = vmatpush2.msra.mxu0 0.0
    %587 = vmatprep.subr.mxu0 0.0
    %588 = vmatpush2.msra.mxu0 0.0
    %589 = vmatprep.subr.mxu0 0.0
    %590 = vmatpush2.msra.mxu0 0.0
    %591 = vmatprep.subr.mxu0 0.0
    %592 = vmatpush2.msra.mxu0 0.0
    %593 = vmatprep.mubr.f32.mxu0 0.0
    %594 = vmatmul.mubr.f32.gmra.mxu0 %v314
    %v595 = vpop.f32.mrf.mxu0
    %v596 = vadd.f32 %v525, %v595
    %v597 = vpop.f32.mrf.mxu0
    %v598 = vadd.f32 %v527, %v597
    %599 = vdwg.mxu0
    %v600 = vmax.f32 %v596, 0.0
    %v601 = vmax.f32 %v598, 0.0
    %v602 = vrot.slane %v600, 4
    %v603 = vadd.f32 %v600, %v602
    %v604 = vrot.slane %v603, 2
    %v605 = vadd.f32 %v603, %v604
    %v606 = vrot.slane %v605, 1
    %v607 = vadd.f32 %v605, %v606
    %v608 = vrot.slane %v601, 4
    %v609 = vadd.f32 %v601, %v608
    %v610 = vrot.slane %v609, 2
    %v611 = vadd.f32 %v609, %v610
    %v612 = vrot.slane %v611, 1
    %v613 = vadd.f32 %v611, %v612
    %v614 = vmul.f32 %v600, %v600
    %v615 = vmul.f32 %v601, %v601
    %v616 = vrot.slane %v614, 4
    %v617 = vadd.f32 %v614, %v616
    %v618 = vrot.slane %v617, 2
    %v619 = vadd.f32 %v617, %v618
    %v620 = vrot.slane %v619, 1
    %v621 = vadd.f32 %v619, %v620
    %v622 = vrot.slane %v615, 4
    %v623 = vadd.f32 %v615, %v622
    %v624 = vrot.slane %v623, 2
    %v625 = vadd.f32 %v623, %v624
    %v626 = vrot.slane %v625, 1
    %v627 = vadd.f32 %v625, %v626
    %v628 = vmul.f32 %v607, 0.125
    %v629 = vmul.f32 %v613, 0.125
    %v630 = vmul.f32 %v621, 0.125
    %v631 = vmul.f32 %v627, 0.125
    %v632 = vmul.f32 %v628, %v628
    %v633 = vmul.f32 %v629, %v629
    %v634 = vsub.f32 %v630, %v632
    %v635 = vsub.f32 %v631, %v633
    %v636 = vmax.f32 %v634, 0.0
    %v637 = vmax.f32 %v635, 0.0
    %v638 = vadd.f32 %v636, 1e-05
    %v639 = vadd.f32 %v637, 1e-05
    %v640 = vrsqrt.pop %v638
    %v641 = vrsqrt.pop %v639
    %v644 = vcombine.low %v640, %v641
    %v645 = vrot.slane %v644, 7
    %v647 = vmul.f32 %v88, %v645
    %v649 = vlaneseq
    %v650 = vshrl.u32 %v649, 7
    %v651 = vsub.s32 1, %v650
    %v652 = vrot.slane %v647, %v651
    %v653 = vlaneseq
    %v654 = vshrl.u32 %v653, 7
    %v655 = vsub.s32 5, %v654
    %v656 = vrot.slane %v647, %v655
    %v659 = vmul.f32 %v628, %v652
    %v660 = vmul.f32 %v629, %v656
    %v663 = vcombine.low %v659, %v660
    %v664 = vrot.slane %v663, 6
    %v666 = vsub.f32 %v88, %v664
    %v667 = vlaneseq
    %v668 = vshrl.u32 %v667, 7
    %v669 = vsub.s32 1, %v668
    %v670 = vrot.slane %v652, %v669
    %v671 = vlaneseq
    %v672 = vshrl.u32 %v671, 7
    %v673 = vsub.s32 1, %v672
    %v674 = vrot.slane %v656, %v673
    %v675 = vmul.f32 %v600, %v670
    %v676 = vmul.f32 %v601, %v674
    %v678 = vlaneseq
    %v679 = vshrl.u32 %v678, 7
    %v680 = vsub.s32 2, %v679
    %v681 = vrot.slane %v666, %v680
    %v682 = vlaneseq
    %v683 = vshrl.u32 %v682, 7
    %v684 = vsub.s32 6, %v683
    %v685 = vrot.slane %v666, %v684
    %v688 = vlaneseq
    %v689 = vshrl.u32 %v688, 7
    %v690 = vsub.s32 2, %v689
    %v691 = vrot.slane %v681, %v690
    %v692 = vlaneseq
    %v693 = vshrl.u32 %v692, 7
    %v694 = vsub.s32 2, %v693
    %v695 = vrot.slane %v685, %v694
    %v696 = vadd.f32 %v675, %v691
    %v697 = vadd.f32 %v676, %v695
    %v698 = vld [vmem:[#allocation8] sm:$0xff]
    %v699 = vld [vmem:[#allocation8 + $0x8] sm:$0xff]
    %v700 = vld [vmem:[#allocation8 + $0x10] sm:$0xff]
    %v701 = vld [vmem:[#allocation8 + $0x18] sm:$0xff]
    %v702 = vld [vmem:[#allocation8 + $0x20] sm:$0xff]
    %v703 = vld [vmem:[#allocation8 + $0x28] sm:$0xff]
    %v704 = vld [vmem:[#allocation8 + $0x30] sm:$0xff]
    %v705 = vld [vmem:[#allocation8 + $0x38] sm:$0xff]
    %v706 = vld [vmem:[#allocation8 + $0x40] sm:$0xff]
    %v707 = vld [vmem:[#allocation8 + $0x48] sm:$0xff]
    %v708 = vld [vmem:[#allocation8 + $0x50] sm:$0xff]
    %v709 = vld [vmem:[#allocation8 + $0x58] sm:$0xff]
    %v710 = vld [vmem:[#allocation8 + $0x60] sm:$0xff]
    %v711 = vld [vmem:[#allocation8 + $0x68] sm:$0xff]
    %v712 = vld [vmem:[#allocation8 + $0x70] sm:$0xff]
    %v713 = vld [vmem:[#allocation8 + $0x78] sm:$0xff]
    %v714 = vld [vmem:[#allocation8 + $0x80] sm:$0xff]
    %v715 = vld [vmem:[#allocation8 + $0x88] sm:$0xff]
    %v716 = vld [vmem:[#allocation8 + $0x90] sm:$0xff]
    %v717 = vld [vmem:[#allocation8 + $0x98] sm:$0xff]
    %v718 = vld [vmem:[#allocation8 + $0xa0] sm:$0xff]
    %v719 = vld [vmem:[#allocation8 + $0xa8] sm:$0xff]
    %v720 = vld [vmem:[#allocation8 + $0xb0] sm:$0xff]
    %v721 = vld [vmem:[#allocation8 + $0xb8] sm:$0xff]
    %v722 = vld [vmem:[#allocation8 + $0xc0] sm:$0xff]
    %v723 = vld [vmem:[#allocation8 + $0xc8] sm:$0xff]
    %v724 = vld [vmem:[#allocation8 + $0xd0] sm:$0xff]
    %v725 = vld [vmem:[#allocation8 + $0xd8] sm:$0xff]
    %v726 = vld [vmem:[#allocation8 + $0xe0] sm:$0xff]
    %v727 = vld [vmem:[#allocation8 + $0xe8] sm:$0xff]
    %v728 = vld [vmem:[#allocation8 + $0xf0] sm:$0xff]
    %v729 = vld [vmem:[#allocation8 + $0xf8] sm:$0xff]
    %v730 = vlaneseq
    %v731 = vshrl.u32 %v730, 7
    %v732 = vsub.s32 0, %v731
    %v733 = vrot.slane %v89, %v732
    %734 = vmatprep.subr.mxu0 0.0
    %735 = vmatpush1.msra.mxu0 %v713
    %736 = vmatprep.subr.mxu0 0.0
    %737 = vmatpush1.msra.mxu0 %v712
    %738 = vmatprep.subr.mxu0 0.0
    %739 = vmatpush1.msra.mxu0 %v711
    %740 = vmatprep.subr.mxu0 0.0
    %741 = vmatpush1.msra.mxu0 %v710
    %742 = vmatprep.subr.mxu0 0.0
    %743 = vmatpush1.msra.mxu0 %v709
    %744 = vmatprep.subr.mxu0 0.0
    %745 = vmatpush1.msra.mxu0 %v708
    %746 = vmatprep.subr.mxu0 0.0
    %747 = vmatpush1.msra.mxu0 %v707
    %748 = vmatprep.subr.mxu0 0.0
    %749 = vmatpush1.msra.mxu0 %v706
    %750 = vmatprep.subr.mxu0 0.0
    %751 = vmatpush1.msra.mxu0 %v705
    %752 = vmatprep.subr.mxu0 0.0
    %753 = vmatpush1.msra.mxu0 %v704
    %754 = vmatprep.subr.mxu0 0.0
    %755 = vmatpush1.msra.mxu0 %v703
    %756 = vmatprep.subr.mxu0 0.0
    %757 = vmatpush1.msra.mxu0 %v702
    %758 = vmatprep.subr.mxu0 0.0
    %759 = vmatpush1.msra.mxu0 %v701
    %760 = vmatprep.subr.mxu0 0.0
    %761 = vmatpush1.msra.mxu0 %v700
    %762 = vmatprep.subr.mxu0 0.0
    %763 = vmatpush1.msra.mxu0 %v699
    %764 = vmatprep.subr.mxu0 0.0
    %765 = vmatpush1.msra.mxu0 %v698
    %766 = vmatprep.subr.mxu0 0.0
    %767 = vmatpush2.msra.mxu0 %v729
    %768 = vmatprep.subr.mxu0 0.0
    %769 = vmatpush2.msra.mxu0 %v728
    %770 = vmatprep.subr.mxu0 0.0
    %771 = vmatpush2.msra.mxu0 %v727
    %772 = vmatprep.subr.mxu0 0.0
    %773 = vmatpush2.msra.mxu0 %v726
    %774 = vmatprep.subr.mxu0 0.0
    %775 = vmatpush2.msra.mxu0 %v725
    %776 = vmatprep.subr.mxu0 0.0
    %777 = vmatpush2.msra.mxu0 %v724
    %778 = vmatprep.subr.mxu0 0.0
    %779 = vmatpush2.msra.mxu0 %v723
    %780 = vmatprep.subr.mxu0 0.0
    %781 = vmatpush2.msra.mxu0 %v722
    %782 = vmatprep.subr.mxu0 0.0
    %783 = vmatpush2.msra.mxu0 %v721
    %784 = vmatprep.subr.mxu0 0.0
    %785 = vmatpush2.msra.mxu0 %v720
    %786 = vmatprep.subr.mxu0 0.0
    %787 = vmatpush2.msra.mxu0 %v719
    %788 = vmatprep.subr.mxu0 0.0
    %789 = vmatpush2.msra.mxu0 %v718
    %790 = vmatprep.subr.mxu0 0.0
    %791 = vmatpush2.msra.mxu0 %v717
    %792 = vmatprep.subr.mxu0 0.0
    %793 = vmatpush2.msra.mxu0 %v716
    %794 = vmatprep.subr.mxu0 0.0
    %795 = vmatpush2.msra.mxu0 %v715
    %796 = vmatprep.subr.mxu0 0.0
    %797 = vmatpush2.msra.mxu0 %v714
    %798 = vmatprep.mubr.f32.mxu0 %v697
    %799 = vmatmul.mubr.f32.gmra.mxu0 %v696
    %v800 = vpop.f32.mrf.mxu0
    %v801 = vadd.f32 %v733, %v800
    %v802 = vpop.f32.mrf.mxu0
    %803 = vdwg.mxu0
    %v804 = vmax.f32 %v801, 0.0
    %v805 = vrot.slane %v804, 4
    %v806 = vadd.f32 %v804, %v805
    %v807 = vrot.slane %v806, 2
    %v808 = vadd.f32 %v806, %v807
    %v809 = vrot.slane %v808, 1
    %v810 = vadd.f32 %v808, %v809
    %v811 = vmul.f32 %v804, %v804
    %v812 = vrot.slane %v811, 4
    %v813 = vadd.f32 %v811, %v812
    %v814 = vrot.slane %v813, 2
    %v815 = vadd.f32 %v813, %v814
    %v816 = vrot.slane %v815, 1
    %v817 = vadd.f32 %v815, %v816
    %v818 = vmul.f32 %v810, 0.125
    %v819 = vmul.f32 %v817, 0.125
    %v820 = vmul.f32 %v818, %v818
    %v821 = vsub.f32 %v819, %v820
    %v822 = vmax.f32 %v821, 0.0
    %v823 = vadd.f32 %v822, 1e-05
    %v824 = vrsqrt.pop %v823
    %v825 = vmul.f32 %v89, %v824
    %v826 = vmul.f32 %v818, %v825
    %v828 = vrot.slane %v826, 7
    %v830 = vsub.f32 %v89, %v828
    %v831 = vlaneseq
    %v832 = vshrl.u32 %v831, 7
    %v833 = vsub.s32 1, %v832
    %v834 = vrot.slane %v825, %v833
    %v835 = vmul.f32 %v804, %v834
    %v836 = vlaneseq
    %v837 = vshrl.u32 %v836, 7
    %v838 = vsub.s32 2, %v837
    %v839 = vrot.slane %v830, %v838
    %v840 = vadd.f32 %v835, %v839
    %v841 = vld [vmem:[#allocation10] sm:$0xff]
    %v842 = vld [vmem:[#allocation10 + $0x8] sm:$0xff]
    %v843 = vld [vmem:[#allocation10 + $0x10] sm:$0xff]
    %v844 = vld [vmem:[#allocation10 + $0x18] sm:$0xff]
    %v845 = vld [vmem:[#allocation10 + $0x20] sm:$0xff]
    %v846 = vld [vmem:[#allocation10 + $0x28] sm:$0xff]
    %v847 = vld [vmem:[#allocation10 + $0x30] sm:$0xff]
    %v848 = vld [vmem:[#allocation10 + $0x38] sm:$0xff]
    %v849 = vld [vmem:[#allocation10 + $0x40] sm:$0xff]
    %v850 = vld [vmem:[#allocation10 + $0x48] sm:$0xff]
    %v851 = vld [vmem:[#allocation10 + $0x50] sm:$0xff]
    %v852 = vld [vmem:[#allocation10 + $0x58] sm:$0xff]
    %v853 = vld [vmem:[#allocation10 + $0x60] sm:$0xff]
    %v854 = vld [vmem:[#allocation10 + $0x68] sm:$0xff]
    %v855 = vld [vmem:[#allocation10 + $0x70] sm:$0xff]
    %v856 = vld [vmem:[#allocation10 + $0x78] sm:$0xff]
    %v857 = vlaneseq
    %v858 = vshrl.u32 %v857, 7
    %v859 = vsub.s32 3, %v858
    %v860 = vrot.slane %v89, %v859
    %861 = vmatprep.subr.mxu0 0.0
    %862 = vmatpush1.msra.mxu0 %v856
    %863 = vmatprep.subr.mxu0 0.0
    %864 = vmatpush1.msra.mxu0 %v855
    %865 = vmatprep.subr.mxu0 0.0
    %866 = vmatpush1.msra.mxu0 %v854
    %867 = vmatprep.subr.mxu0 0.0
    %868 = vmatpush1.msra.mxu0 %v853
    %869 = vmatprep.subr.mxu0 0.0
    %870 = vmatpush1.msra.mxu0 %v852
    %871 = vmatprep.subr.mxu0 0.0
    %872 = vmatpush1.msra.mxu0 %v851
    %873 = vmatprep.subr.mxu0 0.0
    %874 = vmatpush1.msra.mxu0 %v850
    %875 = vmatprep.subr.mxu0 0.0
    %876 = vmatpush1.msra.mxu0 %v849
    %877 = vmatprep.subr.mxu0 0.0
    %878 = vmatpush1.msra.mxu0 %v848
    %879 = vmatprep.subr.mxu0 0.0
    %880 = vmatpush1.msra.mxu0 %v847
    %881 = vmatprep.subr.mxu0 0.0
    %882 = vmatpush1.msra.mxu0 %v846
    %883 = vmatprep.subr.mxu0 0.0
    %884 = vmatpush1.msra.mxu0 %v845
    %885 = vmatprep.subr.mxu0 0.0
    %886 = vmatpush1.msra.mxu0 %v844
    %887 = vmatprep.subr.mxu0 0.0
    %888 = vmatpush1.msra.mxu0 %v843
    %889 = vmatprep.subr.mxu0 0.0
    %890 = vmatpush1.msra.mxu0 %v842
    %891 = vmatprep.subr.mxu0 0.0
    %892 = vmatpush1.msra.mxu0 %v841
    %893 = vmatprep.subr.mxu0 0.0
    %894 = vmatpush2.msra.mxu0 0.0
    %895 = vmatprep.subr.mxu0 0.0
    %896 = vmatpush2.msra.mxu0 0.0
    %897 = vmatprep.subr.mxu0 0.0
    %898 = vmatpush2.msra.mxu0 0.0
    %899 = vmatprep.subr.mxu0 0.0
    %900 = vmatpush2.msra.mxu0 0.0
    %901 = vmatprep.subr.mxu0 0.0
    %902 = vmatpush2.msra.mxu0 0.0
    %903 = vmatprep.subr.mxu0 0.0
    %904 = vmatpush2.msra.mxu0 0.0
    %905 = vmatprep.subr.mxu0 0.0
    %906 = vmatpush2.msra.mxu0 0.0
    %907 = vmatprep.subr.mxu0 0.0
    %908 = vmatpush2.msra.mxu0 0.0
    %909 = vmatprep.subr.mxu0 0.0
    %910 = vmatpush2.msra.mxu0 0.0
    %911 = vmatprep.subr.mxu0 0.0
    %912 = vmatpush2.msra.mxu0 0.0
    %913 = vmatprep.subr.mxu0 0.0
    %914 = vmatpush2.msra.mxu0 0.0
    %915 = vmatprep.subr.mxu0 0.0
    %916 = vmatpush2.msra.mxu0 0.0
    %917 = vmatprep.subr.mxu0 0.0
    %918 = vmatpush2.msra.mxu0 0.0
    %919 = vmatprep.subr.mxu0 0.0
    %920 = vmatpush2.msra.mxu0 0.0
    %921 = vmatprep.subr.mxu0 0.0
    %922 = vmatpush2.msra.mxu0 0.0
    %923 = vmatprep.subr.mxu0 0.0
    %924 = vmatpush2.msra.mxu0 0.0
    %925 = vmatprep.mubr.f32.mxu0 0.0
    %926 = vmatmul.mubr.f32.gmra.mxu0 %v840
    %v927 = vpop.f32.mrf.mxu0
    %v928 = vadd.f32 %v860, %v927
    %v929 = vpop.f32.mrf.mxu0
    %930 = vdwg.mxu0
    %931 = vst [vmem:[#allocation11] sm:$0xff] %v928
    // Predicated region
    $region46: #{tpu_custom_call.1} parent=1 // pred_check
      _
    $region47: #{tpu_custom_call.1} parent=1 // pred_check_branch
      %933 = sbr.rel (0) target = $region49
    $region48: #{tpu_custom_call.1} parent=1 // pred_region
      %s935 = ssub.s32 128, 128
      %936 = vsyncadd [#allocation4], %s935
      %s938 = sshll.u32 [#allocation11], 4
      %s939 = int_to_ptr.vmem [resolvable:$true] %s938
      %941 = dma.vmem_to_hbm [thread:$0]  %s939, 128, %s6, [#allocation4]
    $region49: #{tpu_custom_call.1} parent=1 // pred_fallthru
      _
    // Predicated region
    $region50: #{tpu_custom_call.1} parent=1 // pred_check
      _
    $region51: #{tpu_custom_call.1} parent=1 // pred_check_branch
      %943 = sbr.rel (0) target = $region53
    $region52: #{tpu_custom_call.1} parent=1 // pred_region
      %944 = dma.done [#allocation4], 128
    $region53: #{tpu_custom_call.1} parent=1 // pred_fallthru
      _
    %945 = vsyncpa [#allocation3], 1
    %946 = vsyncpa [#allocation6], 1
    %947 = vsyncpa [#allocation9], 1
    %948 = vsyncpa [#allocation4], 1

</llo_original>
